<compile_context>
chip_gen: v5e
topology: v5e:2x2
jax: 0.10.0
libtpu: 0.0.40
codegen_flags: <defaults>
</compile_context>

<pallas_src>
import functools

import jax
import jax.numpy as jnp
import numpy as np
from jax import lax
from jax.experimental import pallas as pl
from jax.experimental.pallas import tpu as pltpu

EPS = 1e-5


# ----------------------------------------------------------------------------
# Stage kernels (each runs once per image on a lane-dense (C, H*W) block).
# ----------------------------------------------------------------------------
def conv1x1_stats_kernel(x_ref, w_ref, y_ref, s_ref, ss_ref):
    """conv1 (1x1): y = W @ x on the MXU (bf16 in, f32 acc) + BN partial sums."""
    y = jnp.dot(w_ref[...], x_ref[...], preferred_element_type=jnp.float32)
    y_ref[...] = y
    s_ref[...] = jnp.sum(y, axis=1, keepdims=True)
    ss_ref[...] = jnp.sum(y * y, axis=1, keepdims=True)


def bn_relu_conv3x3_stats_kernel(y_ref, sc_ref, sh_ref, w_ref,
                                 o_ref, s_ref, ss_ref, taps_ref, *, H, W):
    """bn1(scale/shift)+relu, im2col 3x3 (stride 1, pad 1) as ONE MXU matmul,
    + BN partial sums.  Taps are built in bf16 via lane rolls (idle XLU slot)
    and border masks, written into a sublane-aligned VMEM scratch."""
    f32, bf16 = jnp.float32, jnp.bfloat16
    z = jnp.maximum(y_ref[...] * sc_ref[...] + sh_ref[...], 0.0).astype(bf16)
    P, M = z.shape

    # One iota, hoisted out of the tap loop; masks via jnp.where (no astype+mul).
    m_idx = lax.broadcasted_iota(jnp.int32, (1, M), 1)
    h_idx = m_idx // W
    w_idx = m_idx % W
    zero = jnp.zeros((), bf16)

    t = 0
    for dy in (-1, 0, 1):
        hv = (h_idx + dy >= 0) & (h_idx + dy < H)
        for dx in (-1, 0, 1):
            valid = hv & (w_idx + dx >= 0) & (w_idx + dx < W)
            shift = (-(dy * W + dx)) % M               # static lane rotation
            rolled = pltpu.roll(z, shift=shift, axis=1) if shift else z
            taps_ref[pl.ds(t * P, P), :] = jnp.where(valid, rolled, zero)
            t += 1

    y = jnp.dot(w_ref[...], taps_ref[...], preferred_element_type=f32)
    o_ref[...] = y
    s_ref[...] = jnp.sum(y, axis=1, keepdims=True)
    ss_ref[...] = jnp.sum(y * y, axis=1, keepdims=True)


def bn_relu_conv1x1_stats_kernel(y_ref, sc_ref, sh_ref, w_ref, o_ref, s_ref, ss_ref):
    """bn2(scale/shift)+relu, conv3 (1x1) on the MXU, + BN partial sums."""
    z = jnp.maximum(y_ref[...] * sc_ref[...] + sh_ref[...], 0.0).astype(jnp.bfloat16)
    y = jnp.dot(w_ref[...], z, preferred_element_type=jnp.float32)
    o_ref[...] = y
    s_ref[...] = jnp.sum(y, axis=1, keepdims=True)
    ss_ref[...] = jnp.sum(y * y, axis=1, keepdims=True)


def bn_residual_relu_kernel(y_ref, x_ref, sc_ref, sh_ref, o_ref):
    """bn3(scale/shift), identity residual add (bf16 x upcast to f32), relu."""
    y = y_ref[...] * sc_ref[...] + sh_ref[...]
    o_ref[...] = jnp.maximum(y + x_ref[...].astype(jnp.float32), 0.0).astype(o_ref.dtype)


# ----------------------------------------------------------------------------
# Wrapper
# ----------------------------------------------------------------------------
def bottleneck_forward(x_nchw, params):
    N, Cin, H, W = x_nchw.shape
    P = params["w1"].shape[1]
    assert Cin == 4 * P, "identity residual requires inplanes == 4 * planes"
    M = H * W
    assert M % 128 == 0, "H*W must be a multiple of 128 to stay lane-dense"
    f32, bf16 = jnp.float32, jnp.bfloat16

    # Free trailing-dim reshape (no NCHW transpose) + bf16 activation streaming.
    x_cm = x_nchw.reshape(N, Cin, M).astype(bf16)

    # Weights pre-transposed once (channels-major matmuls), bf16 for the MXU.
    w1m = params["w1"].T.astype(bf16)                                    # (P, Cin)
    # (ky, kx, cin, cout) -> (cout, ky*kx*cin): matches the im2col tap order.
    w2m = jnp.transpose(params["w2"], (3, 0, 1, 2)).reshape(P, 9 * P).astype(bf16)
    w3m = params["w3"].T.astype(bf16)                                    # (4P, P)

    cparams = pltpu.CompilerParams(
        dimension_semantics=("parallel",),        # batch axis across TCs on v7x
        vmem_limit_bytes=32 * 1024 * 1024,
    )

    def img_spec(C):      # per-image channels-major activation block (lane-dense)
        return pl.BlockSpec((None, C, M), lambda n: (n, 0, 0))

    def resident(shape):  # weights / BN scale-shift: constant index -> stays in VMEM
        return pl.BlockSpec(shape, lambda n: (0,) * len(shape))

    def stat_spec(C):     # per-image (C, 1) partial sums
        return pl.BlockSpec((None, C, 1), lambda n: (n, 0, 0))

    def finalize(s, ss, gamma, beta):
        """Reduce per-image partial sums -> global batch BN, fold into scale/shift."""
        cnt = N * M
        mean = jnp.sum(s, axis=0) / cnt                                  # (C, 1)
        var = jnp.sum(ss, axis=0) / cnt - mean * mean
        scale = gamma.reshape(-1, 1).astype(f32) * lax.rsqrt(var + EPS)
        shift = beta.reshape(-1, 1).astype(f32) - mean * scale
        return scale, shift

    # ---- stage 1: conv1 (1x1) + bn1 partial stats ---------------------------
    y1, s1, ss1 = pl.pallas_call(
        conv1x1_stats_kernel,
        grid=(N,),
        in_specs=[img_spec(Cin), resident((P, Cin))],
        out_specs=[img_spec(P), stat_spec(P), stat_spec(P)],
        out_shape=[jax.ShapeDtypeStruct((N, P, M), f32),
                   jax.ShapeDtypeStruct((N, P, 1), f32),
                   jax.ShapeDtypeStruct((N, P, 1), f32)],
        compiler_params=cparams,
    )(x_cm, w1m)
    sc1, sh1 = finalize(s1, ss1, params["g1"], params["b1"])

    # ---- stage 2: bn1+relu, conv2 (3x3) via im2col, + bn2 partial stats -----
    y2, s2, ss2 = pl.pallas_call(
        functools.partial(bn_relu_conv3x3_stats_kernel, H=H, W=W),
        grid=(N,),
        in_specs=[img_spec(P), resident((P, 1)), resident((P, 1)),
                  resident((P, 9 * P))],
        out_specs=[img_spec(P), stat_spec(P), stat_spec(P)],
        out_shape=[jax.ShapeDtypeStruct((N, P, M), f32),
                   jax.ShapeDtypeStruct((N, P, 1), f32),
                   jax.ShapeDtypeStruct((N, P, 1), f32)],
        scratch_shapes=[pltpu.VMEM((9 * P, M), bf16)],   # aligned im2col scratch
        compiler_params=cparams,
    )(y1, sc1, sh1, w2m)
    sc2, sh2 = finalize(s2, ss2, params["g2"], params["b2"])

    # ---- stage 3: bn2+relu, conv3 (1x1), + bn3 partial stats ----------------
    y3, s3, ss3 = pl.pallas_call(
        bn_relu_conv1x1_stats_kernel,
        grid=(N,),
        in_specs=[img_spec(P), resident((P, 1)), resident((P, 1)),
                  resident((Cin, P))],
        out_specs=[img_spec(Cin), stat_spec(Cin), stat_spec(Cin)],
        out_shape=[jax.ShapeDtypeStruct((N, Cin, M), f32),
                   jax.ShapeDtypeStruct((N, Cin, 1), f32),
                   jax.ShapeDtypeStruct((N, Cin, 1), f32)],
        compiler_params=cparams,
    )(y2, sc2, sh2, w3m)
    sc3, sh3 = finalize(s3, ss3, params["g3"], params["b3"])

    # ---- stage 4: bn3, identity residual, relu ------------------------------
    out_cm = pl.pallas_call(
        bn_residual_relu_kernel,
        grid=(N,),
        in_specs=[img_spec(Cin), img_spec(Cin), resident((Cin, 1)),
                  resident((Cin, 1))],
        out_specs=img_spec(Cin),
        out_shape=jax.ShapeDtypeStruct((N, Cin, M), x_nchw.dtype),
        compiler_params=cparams,
    )(y3, x_cm, sc3, sh3)

    return out_cm.reshape(N, Cin, H, W)                                  # NCHW


# ----------------------------------------------------------------------------
# Params / reference / test
# ----------------------------------------------------------------------------
def init_params(key, inplanes, planes):
    ks = jax.random.split(key, 9)
    f32 = jnp.float32
    return {
        # conv weights stored channels-last-friendly: (Cin, Cout) / (kH, kW, Cin, Cout)
        "w1": 0.1 * jax.random.normal(ks[0], (inplanes, planes), f32),
        "w2": 0.1 * jax.random.normal(ks[1], (3, 3, planes, planes), f32),
        "w3": 0.1 * jax.random.normal(ks[2], (planes, planes * 4), f32),
        "g1": 1.0 + 0.1 * jax.random.normal(ks[3], (1, planes), f32),
        "b1": 0.1 * jax.random.normal(ks[4], (1, planes), f32),
        "g2": 1.0 + 0.1 * jax.random.normal(ks[5], (1, planes), f32),
        "b2": 0.1 * jax.random.normal(ks[6], (1, planes), f32),
        "g3": 1.0 + 0.1 * jax.random.normal(ks[7], (1, planes * 4), f32),
        "b3": 0.1 * jax.random.normal(ks[8], (1, planes * 4), f32),
    }


def bottleneck_ref(x_nchw, p, mxu_dtype=jnp.float32):
    """Pure-JAX reference (XLA convs).  mxu_dtype controls both the activation
    streaming precision and the matmul-input precision so the kernel's
    deliberate bf16 casts can be matched exactly."""
    f32 = jnp.float32
    x = jnp.transpose(x_nchw, (0, 2, 3, 1)).astype(mxu_dtype).astype(f32)  # NHWC
    cast = lambda a: a.astype(mxu_dtype)

    def bn_relu(y, g, b, relu=True):
        mean = jnp.mean(y, axis=(0, 1, 2), keepdims=True)
        var = jnp.mean((y - mean) ** 2, axis=(0, 1, 2), keepdims=True)
        out = (y - mean) * lax.rsqrt(var + EPS) * g.reshape(1, 1, 1, -1) \
            + b.reshape(1, 1, 1, -1)
        return jnp.maximum(out, 0.0) if relu else out

    y1 = jnp.einsum('nhwc,cp->nhwp', cast(x), cast(p["w1"]),
                    preferred_element_type=f32)
    y1 = bn_relu(y1, p["g1"], p["b1"])
    y2 = lax.conv_general_dilated(cast(y1), cast(p["w2"]), (1, 1), 'SAME',
                                  dimension_numbers=('NHWC', 'HWIO', 'NHWC'),
                                  preferred_element_type=f32)
    y2 = bn_relu(y2, p["g2"], p["b2"])
    y3 = jnp.einsum('nhwp,pc->nhwc', cast(y2), cast(p["w3"]),
                    preferred_element_type=f32)
    y3 = bn_relu(y3, p["g3"], p["b3"], relu=False)
    out = jnp.maximum(y3 + x, 0.0)
    return jnp.transpose(out, (0, 3, 1, 2))


if __name__ == "__main__":
    # Bottleneck(inplanes=64, planes=16, stride=1, downsample=None)
    #   -> output channels = 4 * planes = 64 = inplanes (identity residual valid).
    # planes=16 keeps each im2col tap block exactly one bf16 sublane tile;
    # H*W = 256 keeps every activation block lane-dense.
    N, planes, H, W = 2, 16, 16, 16
    inplanes = 4 * planes

    key = jax.random.PRNGKey(0)
    kx, kp = jax.random.split(key)
    x = jax.random.normal(kx, (N, inplanes, H, W), jnp.float32)   # NCHW like PyTorch
    params = init_params(kp, inplanes, planes)

    out = jax.block_until_ready(bottleneck_forward(x, params))
    assert out.shape == (N, inplanes, H, W)

    # Primary structural check: precision-matched reference (bf16 activation
    # streaming + bf16 MXU inputs, f32 accumulation / BN) -- tight tolerance.
    ref_bf16 = jax.block_until_ready(bottleneck_ref(x, params, jnp.bfloat16))
    np.testing.assert_allclose(np.asarray(out), np.asarray(ref_bf16),
                               atol=1e-2, rtol=1e-2)

    # Secondary check vs. pure-f32 (PyTorch-style) math; the looser bound only
    # reflects the intentional bf16 casts of activations and MXU inputs.
    ref_f32 = jax.block_until_ready(bottleneck_ref(x, params, jnp.float32))
    np.testing.assert_allclose(np.asarray(out), np.asarray(ref_f32),
                               atol=1e-1, rtol=1e-1)

    print("KERNEL_OK")
</pallas_src>

<mosaic_0001>
module attributes {stable_mosaic.version = 11 : i64} {
  func.func @conv1x1_stats_kernel(%arg0: i32, %arg1: memref<1x64x256xbf16, #tpu.memory_space<vmem>>, %arg2: memref<16x64xbf16, #tpu.memory_space<vmem>>, %arg3: memref<1x16x256xf32, #tpu.memory_space<vmem>>, %arg4: memref<1x16x1xf32, #tpu.memory_space<vmem>>, %arg5: memref<1x16x1xf32, #tpu.memory_space<vmem>>) attributes {dimension_semantics = [#tpu.dimension_semantics<parallel>], iteration_bounds = array<i64: 2>, scalar_prefetch = 0 : i64, scratch_operands = 0 : i64, tpu.core_type = #tpu.core_type<tc>, window_params = [{transform_indices = @transform_0, window_bounds = array<i64: 1, 64, 256>}, {pipeline_mode = #tpu.pipeline_mode<synchronous>, transform_indices = @transform_1, window_bounds = array<i64: 16, 64>}, {transform_indices = @transform_2, window_bounds = array<i64: 1, 16, 256>}, {transform_indices = @transform_3, window_bounds = array<i64: 1, 16, 1>}, {transform_indices = @transform_4, window_bounds = array<i64: 1, 16, 1>}]} {
    %c0 = arith.constant 0 : index
    %c0_0 = arith.constant 0 : index
    %0 = vector.load %arg2[%c0, %c0_0] : memref<16x64xbf16, #tpu.memory_space<vmem>>, vector<16x64xbf16>
    %c0_1 = arith.constant 0 : index
    %c0_2 = arith.constant 0 : index
    %c0_3 = arith.constant 0 : index
    %1 = vector.load %arg1[%c0_1, %c0_2, %c0_3] : memref<1x64x256xbf16, #tpu.memory_space<vmem>>, vector<1x64x256xbf16>
    %2 = vector.shape_cast %1 : vector<1x64x256xbf16> to vector<64x256xbf16>
    %cst = arith.constant dense<0.000000e+00> : vector<16x256xf32>
    %3 = tpu.matmul %0, %2, %cst {dimension_numbers = #tpu.dot_dimension_numbers<[1], [0], [0], [1], [0, 0, 1, 1], [], []>} : vector<16x64xbf16>, vector<64x256xbf16>, vector<16x256xf32> -> vector<16x256xf32>
    %c0_4 = arith.constant 0 : index
    %c0_5 = arith.constant 0 : index
    %c0_6 = arith.constant 0 : index
    %4 = vector.load %arg3[%c0_4, %c0_5, %c0_6] : memref<1x16x256xf32, #tpu.memory_space<vmem>>, vector<1x16x256xf32>
    %5 = vector.shape_cast %4 : vector<1x16x256xf32> to vector<16x256xf32>
    %6 = vector.shape_cast %3 : vector<16x256xf32> to vector<1x16x256xf32>
    tpu.vector_store %arg3[%c0_4, %c0_5, %c0_6], %6 {strides = array<i32>} : memref<1x16x256xf32, #tpu.memory_space<vmem>>, vector<1x16x256xf32>,
    %cst_7 = arith.constant dense<0.000000e+00> : vector<16xf32>
    %7 = vector.multi_reduction <add>, %3, %cst_7 [1] : vector<16x256xf32> to vector<16xf32>
    %8 = vector.shape_cast %7 : vector<16xf32> to vector<16x1xf32>
    %c0_8 = arith.constant 0 : index
    %c0_9 = arith.constant 0 : index
    %c0_10 = arith.constant 0 : index
    %9 = vector.load %arg4[%c0_8, %c0_9, %c0_10] : memref<1x16x1xf32, #tpu.memory_space<vmem>>, vector<1x16x1xf32>
    %10 = vector.shape_cast %9 : vector<1x16x1xf32> to vector<16x1xf32>
    %11 = vector.shape_cast %8 : vector<16x1xf32> to vector<1x16x1xf32>
    tpu.vector_store %arg4[%c0_8, %c0_9, %c0_10], %11 {strides = array<i32>} : memref<1x16x1xf32, #tpu.memory_space<vmem>>, vector<1x16x1xf32>,
    %12 = arith.mulf %3, %3 : vector<16x256xf32>
    %cst_11 = arith.constant dense<0.000000e+00> : vector<16xf32>
    %13 = vector.multi_reduction <add>, %12, %cst_11 [1] : vector<16x256xf32> to vector<16xf32>
    %14 = vector.shape_cast %13 : vector<16xf32> to vector<16x1xf32>
    %c0_12 = arith.constant 0 : index
    %c0_13 = arith.constant 0 : index
    %c0_14 = arith.constant 0 : index
    %15 = vector.load %arg5[%c0_12, %c0_13, %c0_14] : memref<1x16x1xf32, #tpu.memory_space<vmem>>, vector<1x16x1xf32>
    %16 = vector.shape_cast %15 : vector<1x16x1xf32> to vector<16x1xf32>
    %17 = vector.shape_cast %14 : vector<16x1xf32> to vector<1x16x1xf32>
    tpu.vector_store %arg5[%c0_12, %c0_13, %c0_14], %17 {strides = array<i32>} : memref<1x16x1xf32, #tpu.memory_space<vmem>>, vector<1x16x1xf32>,
    return
  }
  func.func @transform_0(%arg0: i32) -> (i32, i32, i32) {
    %c0_i32 = arith.constant 0 : i32
    %c0_i32_0 = arith.constant 0 : i32
    %c0_i32_1 = arith.constant 0 : i32
    return %arg0, %c0_i32, %c0_i32_0 : i32, i32, i32
  }
  func.func @transform_1(%arg0: i32) -> (i32, i32) {
    %c0_i32 = arith.constant 0 : i32
    %c0_i32_0 = arith.constant 0 : i32
    %c0_i32_1 = arith.constant 0 : i32
    return %c0_i32, %c0_i32_0 : i32, i32
  }
  func.func @transform_2(%arg0: i32) -> (i32, i32, i32) {
    %c0_i32 = arith.constant 0 : i32
    %c0_i32_0 = arith.constant 0 : i32
    %c0_i32_1 = arith.constant 0 : i32
    return %arg0, %c0_i32, %c0_i32_0 : i32, i32, i32
  }
  func.func @transform_3(%arg0: i32) -> (i32, i32, i32) {
    %c0_i32 = arith.constant 0 : i32
    %c0_i32_0 = arith.constant 0 : i32
    %c0_i32_1 = arith.constant 0 : i32
    return %arg0, %c0_i32, %c0_i32_0 : i32, i32, i32
  }
  func.func @transform_4(%arg0: i32) -> (i32, i32, i32) {
    %c0_i32 = arith.constant 0 : i32
    %c0_i32_0 = arith.constant 0 : i32
    %c0_i32_1 = arith.constant 0 : i32
    return %arg0, %c0_i32, %c0_i32_0 : i32, i32, i32
  }
}

</mosaic_0001>

<llo_original>
// kernel: tpu_custom_call.1
$region0: #{tpu_custom_call.1}
  #allocation0 [shape = 'u32[]', space=smem, size = 0x4, offset = 0x4, fixed_abs, tag = 'smem constant byte address 0x4 - core index']
  #allocation1 [shape = 'u32[72,128]{1,0:T(1,128)}', space=vmem, size = 0x9000, scoped, tag = 'internal scratch']
  %s0 = inlined_call_operand.hbm [shape: bf16[2,64,256], index: 0, kind: input, shape index: {}]
  %s1 = inlined_call_operand.hbm [shape: bf16[16,64], index: 1, kind: input, shape index: {}]
  %s2 = inlined_call_operand.hbm [shape: f32[2,16,256], index: 2, kind: output, shape index: {0}]
  %s3 = inlined_call_operand.vmem [shape: f32[2,16,1], index: 3, kind: output, shape index: {1}]
  %s4 = inlined_call_operand.vmem [shape: f32[2,16,1], index: 4, kind: output, shape index: {2}]
  %5 = xla_tuple %s2, %s3, %s4
  %s6 = sld [smem:[#allocation0]]
  $region65: #{tpu_custom_call.1} parent=0
    _
  %s8 = ssub.s32 1, %s6
  %s9 = scalar_select 0, %s8, %s6
  $region1: #{tpu_custom_call.1} parent=0
    #allocation2 [shape = 'u8[65536]{0}', space=vmem, size = 0x10000, scoped, tag = 'input window, operand 0']
    #allocation3 [shape = 's32[2]{0}', space=sflag, size = 0x8, scoped, tag = 'scoped memory for tpu_custom_call.1']
    #allocation4 [shape = 's32[2]{0}', space=sflag, size = 0x8, scoped, tag = 'scoped memory for tpu_custom_call.1']
    #allocation5 [shape = 'u8[4096]{0}', space=vmem, size = 0x1000, scoped, tag = 'input window, operand 1, single buffered']
    #allocation6 [shape = 's32[1]{0}', space=sflag, size = 0x4, scoped, tag = 'scoped memory for tpu_custom_call.1']
    #allocation7 [shape = 'u8[32768]{0}', space=vmem, size = 0x8000, scoped, tag = 'output window, operand 0']
    %10 = vsyncpa [#allocation3], 0
    %s11 = scalar_lea.sflag [#allocation3], 1
    %12 = vsyncpa %s11, 0
    %13 = vsyncpa [#allocation6], 0
    %14 = vsyncpa [#allocation4], 0
    %s15 = scalar_lea.sflag [#allocation4], 1
    %16 = vsyncpa %s15, 0
    loop: start=0, step=1, limit=4
    $region2: #{tpu_custom_call.1} parent=1 // loop_pre_header
      _
    $region3: #{tpu_custom_call.1} parent=1 // loop_header
      %s18 = sphi 0, %s22
      %p19 = scmp.ge.s32.totalorder %s18, 4
      %s28 = sphi 0, %s30
      %s31 = sphi 0, %s28
      %s32 = sphi 0, %s31
      %s48 = sphi 0, %s32
      %s52 = sphi 0, %s52
      %s54 = sphi 0, %s52
      %s55 = sphi 0, %s54
      %s69 = sphi 0, %s55
      %s75 = sphi 0, %s77
      %s78 = sphi 0, %s75
      %s79 = sphi 0, %s78
      %s95 = sphi 0, %s79
      %s101 = sphi 0, %s103
      %s104 = sphi 0, %s101
      %s105 = sphi 0, %s104
      %s121 = sphi 0, %s105
      %s127 = sphi 0, %s129
      %s130 = sphi 0, %s127
      %s131 = sphi 0, %s130
      %s147 = sphi 0, %s131
    $region4: #{tpu_custom_call.1} parent=1 // loop_header_branch
      %21 = sbr.rel (%p19) target = $region8
    $region5: #{tpu_custom_call.1} parent=1 // loop_body
      %s23 = ssub.s32 %s18, 1
      %s24 = ssub.s32 %s18, 2
      %s25 = sadd.s32 %s18, 1
      %s26 = ssub.s32 %s18, %s25
      %p27 = scmp.eq.s32.totalorder %s26, 0
      %s29 = sadd.s32 %s28, 1
      %s30 = scalar_select %p27, %s28, %s29
      %p33 = pneg %p27
      %p34 = scmp.eq.s32.totalorder %s18, 1
      %p35 = por %p33, %p34
      %p36 = scmp.ne.s32.totalorder %s28, %s31
      %p37 = scmp.eq.s32.totalorder %s18, 0
      %p38 = por %p36, %p37
      %p39 = scmp.ne.s32.totalorder %s28, %s31
      %p40 = scmp.eq.s32.totalorder %s23, 1
      %p41 = por %p39, %p40
      %p42 = scmp.ne.s32.totalorder %s31, %s32
      %p43 = scmp.eq.s32.totalorder %s23, 0
      %p44 = por %p42, %p43
      %p45 = scmp.ne.s32.totalorder %s31, %s32
      %p46 = scmp.eq.s32.totalorder %s24, 1
      %p47 = por %p45, %p46
      %p49 = scmp.ne.s32.totalorder %s32, %s48
      %p50 = scmp.eq.s32.totalorder %s24, 0
      %p51 = por %p49, %p50
      %s53 = sadd.s32 %s52, 1
      %p56 = scmp.eq.s32.totalorder %s18, 1
      %p57 = scmp.ne.s32.totalorder %s52, %s54
      %p58 = scmp.eq.s32.totalorder %s18, 0
      %p59 = por %p57, %p58
      %p60 = scmp.ne.s32.totalorder %s52, %s54
      %p61 = scmp.eq.s32.totalorder %s23, 1
      %p62 = por %p60, %p61
      %p63 = scmp.ne.s32.totalorder %s54, %s55
      %p64 = scmp.eq.s32.totalorder %s23, 0
      %p65 = por %p63, %p64
      %p66 = scmp.ne.s32.totalorder %s54, %s55
      %p67 = scmp.eq.s32.totalorder %s24, 1
      %p68 = por %p66, %p67
      %p70 = scmp.ne.s32.totalorder %s55, %s69
      %p71 = scmp.eq.s32.totalorder %s24, 0
      %p72 = por %p70, %p71
      %s73 = ssub.s32 %s18, %s25
      %p74 = scmp.eq.s32.totalorder %s73, 0
      %s76 = sadd.s32 %s75, 1
      %s77 = scalar_select %p74, %s75, %s76
      %p80 = pneg %p74
      %p81 = scmp.eq.s32.totalorder %s18, 1
      %p82 = por %p80, %p81
      %p83 = scmp.ne.s32.totalorder %s75, %s78
      %p84 = scmp.eq.s32.totalorder %s18, 0
      %p85 = por %p83, %p84
      %p86 = scmp.ne.s32.totalorder %s75, %s78
      %p87 = scmp.eq.s32.totalorder %s23, 1
      %p88 = por %p86, %p87
      %p89 = scmp.ne.s32.totalorder %s78, %s79
      %p90 = scmp.eq.s32.totalorder %s23, 0
      %p91 = por %p89, %p90
      %p92 = scmp.ne.s32.totalorder %s78, %s79
      %p93 = scmp.eq.s32.totalorder %s24, 1
      %p94 = por %p92, %p93
      %p96 = scmp.ne.s32.totalorder %s79, %s95
      %p97 = scmp.eq.s32.totalorder %s24, 0
      %p98 = por %p96, %p97
      %s99 = ssub.s32 %s18, %s25
      %p100 = scmp.eq.s32.totalorder %s99, 0
      %s102 = sadd.s32 %s101, 1
      %s103 = scalar_select %p100, %s101, %s102
      %p106 = pneg %p100
      %p107 = scmp.eq.s32.totalorder %s18, 1
      %p108 = por %p106, %p107
      %p109 = scmp.ne.s32.totalorder %s101, %s104
      %p110 = scmp.eq.s32.totalorder %s18, 0
      %p111 = por %p109, %p110
      %p112 = scmp.ne.s32.totalorder %s101, %s104
      %p113 = scmp.eq.s32.totalorder %s23, 1
      %p114 = por %p112, %p113
      %p115 = scmp.ne.s32.totalorder %s104, %s105
      %p116 = scmp.eq.s32.totalorder %s23, 0
      %p117 = por %p115, %p116
      %p118 = scmp.ne.s32.totalorder %s104, %s105
      %p119 = scmp.eq.s32.totalorder %s24, 1
      %p120 = por %p118, %p119
      %p122 = scmp.ne.s32.totalorder %s105, %s121
      %p123 = scmp.eq.s32.totalorder %s24, 0
      %p124 = por %p122, %p123
      %s125 = ssub.s32 %s18, %s25
      %p126 = scmp.eq.s32.totalorder %s125, 0
      %s128 = sadd.s32 %s127, 1
      %s129 = scalar_select %p126, %s127, %s128
      %p132 = pneg %p126
      %p133 = scmp.eq.s32.totalorder %s18, 1
      %p134 = por %p132, %p133
      %p135 = scmp.ne.s32.totalorder %s127, %s130
      %p136 = scmp.eq.s32.totalorder %s18, 0
      %p137 = por %p135, %p136
      %p138 = scmp.ne.s32.totalorder %s127, %s130
      %p139 = scmp.eq.s32.totalorder %s23, 1
      %p140 = por %p138, %p139
      %p141 = scmp.ne.s32.totalorder %s130, %s131
      %p142 = scmp.eq.s32.totalorder %s23, 0
      %p143 = por %p141, %p142
      %p144 = scmp.ne.s32.totalorder %s130, %s131
      %p145 = scmp.eq.s32.totalorder %s24, 1
      %p146 = por %p144, %p145
      %p148 = scmp.ne.s32.totalorder %s131, %s147
      %p149 = scmp.eq.s32.totalorder %s24, 0
      %p150 = por %p148, %p149
      %p151 = scmp.le.s32.totalorder 1, %s18
      %p152 = scmp.lt.s32.totalorder %s18, 3
      %p153 = pnand %p151, %p152
      %p154 = pneg %p153
      // Predicated region
      $region9: #{tpu_custom_call.1} parent=5 // pred_check
        _
      $region10: #{tpu_custom_call.1} parent=5 // pred_check_branch
        %156 = sbr.rel (%p153) target = $region12
      $region11: #{tpu_custom_call.1} parent=5 // pred_region
        %s157 = ssub.s32 %s18, 1
        // Predicated region
        $region13: #{tpu_custom_call.1} parent=11 // pred_check
          %p158 = pneg %p65
        $region14: #{tpu_custom_call.1} parent=11 // pred_check_branch
          %160 = sbr.rel (%p158) target = $region16
        $region15: #{tpu_custom_call.1} parent=11 // pred_region
          %162 = vsyncadd [#allocation6], 0
          %s163 = sshll.u32 %s1, 4
          %s164 = int_to_ptr.hbm [resolvable:$true] %s163
          %s165 = sshll.u32 [#allocation5], 4
          %s166 = int_to_ptr.vmem [resolvable:$true] %s165
          %171 = dma.hbm_to_vmem [thread:$0]  %s164, 128, %s166, [#allocation6], 64, 64, 4
        $region16: #{tpu_custom_call.1} parent=11 // pred_fallthru
          _
      $region12: #{tpu_custom_call.1} parent=5 // pred_fallthru
        _
      %p172 = scmp.lt.s32.totalorder %s18, 2
      // Predicated region
      $region17: #{tpu_custom_call.1} parent=5 // pred_check
        %p173 = pneg %p172
      $region18: #{tpu_custom_call.1} parent=5 // pred_check_branch
        %175 = sbr.rel (%p173) target = $region20
      $region19: #{tpu_custom_call.1} parent=5 // pred_region
        // Predicated region
        $region21: #{tpu_custom_call.1} parent=19 // pred_check
          %p176 = pneg %p38
        $region22: #{tpu_custom_call.1} parent=19 // pred_check_branch
          %178 = sbr.rel (%p176) target = $region24
        $region23: #{tpu_custom_call.1} parent=19 // pred_region
          %s179 = sand.u32 %s28, 1
          %s180 = scalar_lea.sflag [#allocation3], %s179
          %s181 = sand.u32 %s28, 1
          %s182 = smul.addr %s181, 64
          %s183 = scalar_lea.vmem [#allocation2], %s182
          %185 = vsyncadd %s180, 0
          %s186 = smul.addr %s18, 16
          %s187 = smul.addr %s186, 4
          %s188 = scalar_lea.hbm %s0, %s187
          %s189 = sshll.u32 %s188, 4
          %s190 = int_to_ptr.hbm [resolvable:$true] %s189
          %s191 = sshll.u32 %s183, 4
          %s192 = int_to_ptr.vmem [resolvable:$true] %s191
          %197 = dma.hbm_to_vmem [thread:$0]  %s190, 1024, %s192, %s180, 128, 128, 8
        $region24: #{tpu_custom_call.1} parent=19 // pred_fallthru
          _
      $region20: #{tpu_custom_call.1} parent=5 // pred_fallthru
        _
      %p198 = scmp.le.s32.totalorder 1, %s18
      %p199 = scmp.lt.s32.totalorder %s18, 3
      %p200 = pnand %p198, %p199
      %p201 = pneg %p200
      // Predicated region
      $region25: #{tpu_custom_call.1} parent=5 // pred_check
        _
      $region26: #{tpu_custom_call.1} parent=5 // pred_check_branch
        %203 = sbr.rel (%p200) target = $region28
      $region27: #{tpu_custom_call.1} parent=5 // pred_region
        %s204 = ssub.s32 %s18, 1
        %s205 = sand.u32 %s31, 1
        %s206 = scalar_lea.sflag [#allocation3], %s205
        %s207 = sand.u32 %s31, 1
        %s208 = smul.addr %s207, 64
        %s209 = scalar_lea.vmem [#allocation2], %s208
        // Predicated region
        $region29: #{tpu_custom_call.1} parent=27 // pred_check
          %p210 = pneg %p44
        $region30: #{tpu_custom_call.1} parent=27 // pred_check_branch
          %212 = sbr.rel (%p210) target = $region32
        $region31: #{tpu_custom_call.1} parent=27 // pred_region
          %214 = dma.done %s206, 1024
        $region32: #{tpu_custom_call.1} parent=27 // pred_fallthru
          _
        // Predicated region
        $region33: #{tpu_custom_call.1} parent=27 // pred_check
          %p215 = pneg %p65
        $region34: #{tpu_custom_call.1} parent=27 // pred_check_branch
          %217 = sbr.rel (%p215) target = $region36
        $region35: #{tpu_custom_call.1} parent=27 // pred_region
          %219 = dma.done [#allocation6], 128
        $region36: #{tpu_custom_call.1} parent=27 // pred_fallthru
          _
        %s220 = sand.u32 %s31, 1
        %s221 = scalar_lea.sflag [#allocation3], %s220
        %s222 = sand.u32 %s31, 1
        %s223 = smul.addr %s222, 64
        %s224 = scalar_lea.vmem [#allocation2], %s223
        %p225 = pneg %p44
        %p226 = pneg %p41
        %p227 = pneg %p65
        %p228 = pneg %p62
        %p229 = pneg %p91
        %p230 = pneg %p88
        %s231 = sand.u32 %s78, 1
        %s232 = scalar_lea.sflag [#allocation4], %s231
        %s233 = sand.u32 %s78, 1
        %s234 = smul.addr %s233, 32
        %s235 = scalar_lea.vmem [#allocation7], %s234
        %p236 = pneg %p117
        %p237 = pneg %p114
        %p238 = scmp.lt.s32.totalorder %s23, 1
        %s239 = scalar_select %p238, %s23, 1
        %s240 = smul.addr %s239, 2
        %s241 = smul.addr %s240, 8
        %s242 = scalar_lea.vmem %s3, %s241
        %p243 = pneg %p143
        %p244 = pneg %p140
        %p245 = scmp.lt.s32.totalorder %s23, 1
        %s246 = scalar_select %p245, %s23, 1
        %s247 = smul.addr %s246, 2
        %s248 = smul.addr %s247, 8
        %s249 = scalar_lea.vmem %s4, %s248
        %p250 = scmp.lt.s32.totalorder %s23, 1
        %s251 = scalar_select %p250, %s23, 1
        %s252 = smul.addr %s251, 2
        %s253 = smul.addr %s252, 8
        %s254 = scalar_lea.vmem %s3, %s253
        %p255 = scmp.lt.s32.totalorder %s23, 1
        %s256 = scalar_select %p255, %s23, 1
        %s257 = smul.addr %s256, 2
        %s258 = smul.addr %s257, 8
        %s259 = scalar_lea.vmem %s4, %s258
        %v261 = vld [vmem:[#allocation5] sm:$0xf]
        %v262 = vld [vmem:[#allocation5 + $0x4] sm:$0xf]
        %v263 = vld [vmem:[%s209] sm:$0xff]
        %v264 = vld [vmem:[%s209 + $0x8] sm:$0xff]
        %v265 = vld [vmem:[%s209 + $0x10] sm:$0xff]
        %v266 = vld [vmem:[%s209 + $0x18] sm:$0xff]
        %v267 = vld [vmem:[%s209 + $0x20] sm:$0xff]
        %v268 = vld [vmem:[%s209 + $0x28] sm:$0xff]
        %v269 = vld [vmem:[%s209 + $0x30] sm:$0xff]
        %v270 = vld [vmem:[%s209 + $0x38] sm:$0xff]
        %v273 = vunpack.c.l.b16 %v261
        %v274 = vunpack.c.l.b16 %v262
        %v275 = vpack.c.b16 %v274, %v273
        %v284 = vunpack.c.l.b16 %v263
        %v285 = vunpack.c.h.b16 %v263
        %v286 = vunpack.c.l.b16 %v264
        %v287 = vunpack.c.h.b16 %v264
        %v288 = vunpack.c.l.b16 %v265
        %v289 = vunpack.c.h.b16 %v265
        %v290 = vunpack.c.l.b16 %v266
        %v291 = vunpack.c.h.b16 %v266
        %v292 = vunpack.c.l.b16 %v267
        %v293 = vunpack.c.h.b16 %v267
        %v294 = vunpack.c.l.b16 %v268
        %v295 = vunpack.c.h.b16 %v268
        %v296 = vunpack.c.l.b16 %v269
        %v297 = vunpack.c.h.b16 %v269
        %v298 = vunpack.c.l.b16 %v270
        %v299 = vunpack.c.h.b16 %v270
        %v300 = vpack.c.b16 %v286, %v284
        %v301 = vpack.c.b16 %v287, %v285
        %v302 = vpack.c.b16 %v290, %v288
        %v303 = vpack.c.b16 %v291, %v289
        %v304 = vpack.c.b16 %v294, %v292
        %v305 = vpack.c.b16 %v295, %v293
        %v306 = vpack.c.b16 %v298, %v296
        %v307 = vpack.c.b16 %v299, %v297
        %vm316 = vcmask 523264
        %v318 = vsel %vm316, %v275, 0
        %320 = vmatpush.bf16.msra.mxu0 0
        %321 = vmatpush.bf16.msra.mxu0 0
        %322 = vmatpush.bf16.msra.mxu0 0
        %323 = vmatpush.bf16.msra.mxu0 0
        %324 = vmatpush.bf16.msra.mxu0 %v306
        %325 = vmatpush.bf16.msra.mxu0 %v304
        %326 = vmatpush.bf16.msra.mxu0 %v302
        %327 = vmatpush.bf16.msra.mxu0 %v300
        %328 = vmatmul.bf16.gmra.mxu0 %v318
        %v329 = vpop.f32.mrf.mxu0
        %v330 = vadd.f32 0.0, %v329
        %v331 = vpop.f32.mrf.mxu0
        %v332 = vadd.f32 0.0, %v331
        %333 = vdwg.mxu0
        %334 = vmatpush.bf16.msra.mxu0 0
        %335 = vmatpush.bf16.msra.mxu0 0
        %336 = vmatpush.bf16.msra.mxu0 0
        %337 = vmatpush.bf16.msra.mxu0 0
        %338 = vmatpush.bf16.msra.mxu0 %v307
        %339 = vmatpush.bf16.msra.mxu0 %v305
        %340 = vmatpush.bf16.msra.mxu0 %v303
        %341 = vmatpush.bf16.msra.mxu0 %v301
        %342 = vmatmul.bf16.gmra.mxu0 %v318
        %v343 = vpop.f32.mrf.mxu0
        %v344 = vadd.f32 0.0, %v343
        %v345 = vpop.f32.mrf.mxu0
        %v346 = vadd.f32 0.0, %v345
        %347 = vdwg.mxu0
        %348 = vst [vmem:[%s235] sm:$0xff] %v330
        %349 = vst [vmem:[%s235 + $0x8] sm:$0xff] %v344
        %350 = vst [vmem:[%s235 + $0x10] sm:$0xff] %v332
        %351 = vst [vmem:[%s235 + $0x18] sm:$0xff] %v346
        %v352 = vadd.f32 %v330, %v344
        %353 = vadd.xlane.f32.xlu0 %v352
        %v354 = vpop.xlane.xlu0 %353
        %v355 = vadd.f32 %v332, %v346
        %356 = vadd.xlane.f32.xlu0 %v355
        %v357 = vpop.xlane.xlu0 %356
        %vm358 = vcmask 7168
        %359 = vst.msk [vmem:[%s254] sm:$0xff] %vm358, %v354
        %360 = vst.msk [vmem:[%s254 + $0x8] sm:$0xff] %vm358, %v357
        %v361 = vmul.f32 %v330, %v330
        %v362 = vmul.f32 %v344, %v344
        %v363 = vmul.f32 %v332, %v332
        %v364 = vmul.f32 %v346, %v346
        %v365 = vadd.f32 %v361, %v362
        %366 = vadd.xlane.f32.xlu0 %v365
        %v367 = vpop.xlane.xlu0 %366
        %v368 = vadd.f32 %v363, %v364
        %369 = vadd.xlane.f32.xlu0 %v368
        %v370 = vpop.xlane.xlu0 %369
        %371 = vst.msk [vmem:[%s259] sm:$0xff] %vm358, %v367
        %372 = vst.msk [vmem:[%s259 + $0x8] sm:$0xff] %vm358, %v370
        %s373 = sand.u32 %s78, 1
        %s374 = scalar_lea.sflag [#allocation4], %s373
        %s375 = sand.u32 %s78, 1
        %s376 = smul.addr %s375, 32
        %s377 = scalar_lea.vmem [#allocation7], %s376
        %p378 = scmp.lt.s32.totalorder %s23, 1
        %s379 = scalar_select %p378, %s23, 1
        %s380 = smul.addr %s379, 2
        %s381 = smul.addr %s380, 8
        %s382 = scalar_lea.vmem %s3, %s381
        %p383 = scmp.lt.s32.totalorder %s23, 1
        %s384 = scalar_select %p383, %s23, 1
        %s385 = smul.addr %s384, 2
        %s386 = smul.addr %s385, 8
        %s387 = scalar_lea.vmem %s4, %s386
        // Predicated region
        $region37: #{tpu_custom_call.1} parent=27 // pred_check
          %p388 = pneg %p88
        $region38: #{tpu_custom_call.1} parent=27 // pred_check_branch
          %390 = sbr.rel (%p388) target = $region40
        $region39: #{tpu_custom_call.1} parent=27 // pred_region
          %392 = vsyncadd %s374, 0
          %s393 = smul.addr %s23, 4
          %s394 = smul.addr %s393, 8
          %s395 = scalar_lea.hbm %s2, %s394
          %s396 = sshll.u32 %s377, 4
          %s397 = int_to_ptr.vmem [resolvable:$true] %s396
          %s398 = sshll.u32 %s395, 4
          %s399 = int_to_ptr.hbm [resolvable:$true] %s398
          %404 = dma.vmem_to_hbm [thread:$0]  %s397, 512, %s399, %s374, 256, 256, 16
        $region40: #{tpu_custom_call.1} parent=27 // pred_fallthru
          _
        // Predicated region
        $region41: #{tpu_custom_call.1} parent=27 // pred_check
          %p405 = pneg %p114
        $region42: #{tpu_custom_call.1} parent=27 // pred_check_branch
          %407 = sbr.rel (%p405) target = $region44
        $region43: #{tpu_custom_call.1} parent=27 // pred_region
          _
        $region44: #{tpu_custom_call.1} parent=27 // pred_fallthru
          _
        // Predicated region
        $region45: #{tpu_custom_call.1} parent=27 // pred_check
          %p408 = pneg %p140
        $region46: #{tpu_custom_call.1} parent=27 // pred_check_branch
          %410 = sbr.rel (%p408) target = $region48
        $region47: #{tpu_custom_call.1} parent=27 // pred_region
          _
        $region48: #{tpu_custom_call.1} parent=27 // pred_fallthru
          _
      $region28: #{tpu_custom_call.1} parent=5 // pred_fallthru
        _
      %p411 = scmp.le.s32.totalorder 2, %s18
      // Predicated region
      $region49: #{tpu_custom_call.1} parent=5 // pred_check
        %p412 = pneg %p411
      $region50: #{tpu_custom_call.1} parent=5 // pred_check_branch
        %414 = sbr.rel (%p412) target = $region52
      $region51: #{tpu_custom_call.1} parent=5 // pred_region
        %s415 = ssub.s32 %s18, 2
        // Predicated region
        $region53: #{tpu_custom_call.1} parent=51 // pred_check
          %p416 = pneg %p94
        $region54: #{tpu_custom_call.1} parent=51 // pred_check_branch
          %418 = sbr.rel (%p416) target = $region56
        $region55: #{tpu_custom_call.1} parent=51 // pred_region
          %s419 = sand.u32 %s79, 1
          %s420 = scalar_lea.sflag [#allocation4], %s419
          %s421 = sand.u32 %s79, 1
          %s422 = smul.addr %s421, 32
          %s423 = scalar_lea.vmem [#allocation7], %s422
          %425 = dma.done %s420, 512
        $region56: #{tpu_custom_call.1} parent=51 // pred_fallthru
          _
        // Predicated region
        $region57: #{tpu_custom_call.1} parent=51 // pred_check
          %p426 = pneg %p120
        $region58: #{tpu_custom_call.1} parent=51 // pred_check_branch
          %428 = sbr.rel (%p426) target = $region60
        $region59: #{tpu_custom_call.1} parent=51 // pred_region
          %p429 = scmp.lt.s32.totalorder %s24, 1
          %s430 = scalar_select %p429, %s24, 1
          %s431 = smul.addr %s430, 2
          %s432 = smul.addr %s431, 8
          %s433 = scalar_lea.vmem %s3, %s432
        $region60: #{tpu_custom_call.1} parent=51 // pred_fallthru
          _
        // Predicated region
        $region61: #{tpu_custom_call.1} parent=51 // pred_check
          %p434 = pneg %p146
        $region62: #{tpu_custom_call.1} parent=51 // pred_check_branch
          %436 = sbr.rel (%p434) target = $region64
        $region63: #{tpu_custom_call.1} parent=51 // pred_region
          %p437 = scmp.lt.s32.totalorder %s24, 1
          %s438 = scalar_select %p437, %s24, 1
          %s439 = smul.addr %s438, 2
          %s440 = smul.addr %s439, 8
          %s441 = scalar_lea.vmem %s4, %s440
        $region64: #{tpu_custom_call.1} parent=51 // pred_fallthru
          _
      $region52: #{tpu_custom_call.1} parent=5 // pred_fallthru
        _
    $region6: #{tpu_custom_call.1} parent=1 // loop_footer
      %s22 = sadd.s32 1, %s18
    $region7: #{tpu_custom_call.1} parent=1 // loop_footer_branch
      %17 = sbr.rel target = $region3
    $region8: #{tpu_custom_call.1} parent=1 // loop_exit
      _
    %442 = vsyncpa [#allocation3], 1
    %s443 = scalar_lea.sflag [#allocation3], 1
    %444 = vsyncpa %s443, 1
    %445 = vsyncpa [#allocation6], 1
    %446 = vsyncpa [#allocation4], 1
    %s447 = scalar_lea.sflag [#allocation4], 1
    %448 = vsyncpa %s447, 1

</llo_original>
